<compile_context>
chip_gen: v7x
topology: tpu7x:2x2x1
jax: 0.10.0
libtpu: 0.0.40
codegen_flags: <defaults>
</compile_context>

<pallas_src>
import functools

import jax
import jax.numpy as jnp
import numpy as np
from jax.experimental import pallas as pl
from jax.experimental.pallas import tpu as pltpu

_MXU_DTYPE = jnp.bfloat16          # MXU / DMA dtype; accumulation & VPU math are f32
_VMEM_LIMIT = 32 * 1024 * 1024     # 32 MiB scoped VMEM: headroom on v7x (64 MiB phys)


# --------------------------------------------------------------------------
# PyTorch helpers reproduced in numpy / plain JAX
# --------------------------------------------------------------------------
def get_relative_distances(window_size):
    indices = np.array([[x, y] for x in range(window_size) for y in range(window_size)])
    return indices[None, :, :] - indices[:, None, :]


# TODO(synk): nn.Unfold / nn.Fold are an overlapping im2col gather / overlap-add
# scatter. Fusing the gather into kernel 2 (scalar-prefetched window offsets or a
# manual DMA gather) would cut the 9x qkv duplication, but the lane-dense layout
# needs a per-lane (b, head, window) gather+transpose that BlockSpec index maps
# cannot express, so both stay in plain JAX here.
def _unfold(x, k, s):
    """nn.Unfold(kernel_size=k, stride=s) on NCHW input -> (B, C*k*k, L)."""
    B, C, H, W = x.shape
    oh = (H - k) // s + 1
    ow = (W - k) // s + 1
    patches = []
    for i in range(k):
        for j in range(k):
            patches.append(x[:, :, i:i + s * oh:s, j:j + s * ow:s])  # (B, C, oh, ow)
    patches = jnp.stack(patches, axis=2)                             # (B, C, k*k, oh, ow)
    return patches.reshape(B, C * k * k, oh * ow)


def _fold(cols, output_size, k, s):
    """nn.Fold(output_size, kernel_size=k, stride=s): overlap-add col2im."""
    B, CK, L = cols.shape
    C = CK // (k * k)
    OH, OW = output_size
    oh = (OH - k) // s + 1
    ow = (OW - k) // s + 1
    cols = cols.reshape(B, C, k, k, oh, ow)
    out = jnp.zeros((B, C, OH, OW), cols.dtype)
    for i in range(k):
        for j in range(k):
            out = out.at[:, :, i:i + s * oh:s, j:j + s * ow:s].add(cols[:, :, i, j])
    return out


# --------------------------------------------------------------------------
# Pallas kernel 1: row-tiled matmul (to_qkv projection)
# --------------------------------------------------------------------------
def _qkv_kernel(x_ref, w_ref, o_ref):
    # x/w are already bf16 (pre-cast in the wrapper); accumulate in f32 on the MXU.
    o_ref[...] = jnp.dot(x_ref[...], w_ref[...],
                         preferred_element_type=jnp.float32).astype(o_ref.dtype)


def _row_matmul(x, w, *, tile_m=64, out_dtype=_MXU_DTYPE):
    """(M, K) @ (K, N); rows tiled over a 'parallel' grid, bf16 weight resident."""
    M, K = x.shape
    _, N = w.shape
    mp = pl.cdiv(M, tile_m) * tile_m                 # ceil-div grid + zero pad
    if mp != M:
        x = jnp.pad(x, ((0, mp - M), (0, 0)))
    cost = pl.CostEstimate(flops=2 * mp * K * N, transcendentals=0,
                           bytes_accessed=(mp * K + K * N + mp * N) * 2)
    out = pl.pallas_call(
        _qkv_kernel,
        out_shape=jax.ShapeDtypeStruct((mp, N), out_dtype),
        grid_spec=pltpu.PrefetchScalarGridSpec(
            num_scalar_prefetch=0,
            grid=(mp // tile_m,),
            in_specs=[
                # Streamed rows.  TODO(synk): pipeline_mode=pl.Buffered(3) if this
                # DMA is exposed at production M.
                pl.BlockSpec((tile_m, K), lambda i: (i, 0)),
                # Resident bf16 weight (constant index map).  At production K/N,
                # K-tile with a VMEM f32 accumulator instead of a resident block
                # (v7x has only 64 MiB physical VMEM).
                pl.BlockSpec((K, N), lambda i: (0, 0)),
            ],
            out_specs=pl.BlockSpec((tile_m, N), lambda i: (i, 0)),
        ),
        compiler_params=pltpu.CompilerParams(
            dimension_semantics=("parallel",),
            vmem_limit_bytes=_VMEM_LIMIT,
        ),
        cost_estimate=cost,
    )(x, w)
    return out[:M]


# --------------------------------------------------------------------------
# Pallas kernel 2: lane-dense per-window attention (QK^T + bias, softmax, AV)
#
# Layout: q, v, out are (W, D, Gt); k is pre-transposed to (D, W, Gt); bias is
# (W, W, Gt) pre-broadcast over lanes.  Gt = 128 windows per vreg lane; every
# contraction is over the tiny W=9 / D=8 axes and runs as VPU multiply-adds.
# --------------------------------------------------------------------------
def _window_attn_kernel(q_ref, k_ref, v_ref, bias_ref, o_ref, *, scale):
    W, D, _ = q_ref.shape

    q = q_ref[...].astype(jnp.float32) * scale           # scale folded into Q load
    v = v_ref[...].astype(jnp.float32)                   # (W, D, Gt)

    # scores  s[i, j, g] = bias[i, j, g] + sum_d q[i, d, g] * k[j, d, g]
    s = bias_ref[...]                                     # (W, W, Gt) f32
    for d in range(D):
        kd = k_ref[d].astype(jnp.float32)                 # (W, Gt) direct tile load
        s = s + q[:, d:d + 1, :] * kd[None, :, :]         # (W,1,Gt)*(1,W,Gt)

    # numerically stable softmax over j — elementwise across 128 windows per vreg
    m = s[:, 0:1, :]
    for j in range(1, W):
        m = jnp.maximum(m, s[:, j:j + 1, :])
    e = jnp.exp(s - m)
    den = e[:, 0:1, :]
    for j in range(1, W):
        den = den + e[:, j:j + 1, :]
    p = e * pl.reciprocal(den, approx=True)               # EUP vrcp, ~free slot

    # out[i, d, g] = sum_j p[i, j, g] * v[j, d, g]
    o = p[:, 0:1, :] * v[0][None, :, :]
    for j in range(1, W):
        o = o + p[:, j:j + 1, :] * v[j][None, :, :]
    o_ref[...] = o.astype(o_ref.dtype)                    # lane-dense (…,128) store


def _window_attention(q, k_t, v, bias_lane, *, scale, tile_g=128):
    """q, v: (W, D, Gp); k_t: (D, W, Gp); bias_lane: (W, W, tile_g); Gp % tile_g == 0."""
    W, D, Gp = q.shape
    assert Gp % tile_g == 0
    cost = pl.CostEstimate(
        flops=Gp * (4 * W * W * D + 6 * W * W),
        transcendentals=Gp * W * W,
        bytes_accessed=2 * (3 * W * D * Gp) + 2 * W * D * Gp + 4 * W * W * tile_g)
    out = pl.pallas_call(
        functools.partial(_window_attn_kernel, scale=scale),
        out_shape=jax.ShapeDtypeStruct((W, D, Gp), _MXU_DTYPE),   # bf16 writeback
        grid_spec=pltpu.PrefetchScalarGridSpec(
            num_scalar_prefetch=0,
            grid=(Gp // tile_g,),
            in_specs=[
                pl.BlockSpec((W, D, tile_g), lambda i: (0, 0, i)),
                pl.BlockSpec((D, W, tile_g), lambda i: (0, 0, i)),
                pl.BlockSpec((W, D, tile_g), lambda i: (0, 0, i)),
                pl.BlockSpec((W, W, tile_g), lambda i: (0, 0, 0)),   # resident bias
            ],
            out_specs=pl.BlockSpec((W, D, tile_g), lambda i: (0, 0, i)),
        ),
        compiler_params=pltpu.CompilerParams(
            dimension_semantics=("parallel",),
            vmem_limit_bytes=_VMEM_LIMIT,
        ),
        cost_estimate=cost,
    )(q, k_t, v, bias_lane)
    return out


# --------------------------------------------------------------------------
# Pallas kernel 3: fused to_out head (Linear -> LayerNorm -> GELU -> Linear)
# --------------------------------------------------------------------------
def _out_head_kernel(x_ref, w1_ref, b1_ref, g_ref, bt_ref, w2_ref, b2_ref, o_ref, *, eps):
    h = jnp.dot(x_ref[...], w1_ref[...], preferred_element_type=jnp.float32)
    h = h + b1_ref[...]
    # LayerNorm over dh=16 lanes: XLU reduce on a mostly-empty vreg at demo dims;
    # accepted (disappears at production dh >= 128).
    mu = jnp.mean(h, axis=-1, keepdims=True)
    var = jnp.mean(jnp.square(h - mu), axis=-1, keepdims=True)
    h = (h - mu) * jax.lax.rsqrt(var + eps)
    h = h * g_ref[...] + bt_ref[...]
    # TODO(synk): tanh-approx GELU (EUP-friendly) vs torch nn.GELU() erf — ~1e-3
    # deliberate divergence covered by the test tolerance.
    h = jax.nn.gelu(h, approximate=True)
    y = jnp.dot(h.astype(_MXU_DTYPE), w2_ref[...], preferred_element_type=jnp.float32)
    o_ref[...] = (y + b2_ref[...]).astype(o_ref.dtype)


def _out_head(x, w1, b1, gamma, beta, w2, b2, *, eps=1e-5, tile_m=64):
    M, K = x.shape
    H = w1.shape[1]
    N = w2.shape[1]
    mp = pl.cdiv(M, tile_m) * tile_m
    if mp != M:
        x = jnp.pad(x, ((0, mp - M), (0, 0)))
    cost = pl.CostEstimate(
        flops=2 * mp * K * H + 2 * mp * H * N + 10 * mp * H,
        transcendentals=mp * H,
        bytes_accessed=2 * (mp * K + K * H + H * N) + 4 * mp * N)
    out = pl.pallas_call(
        functools.partial(_out_head_kernel, eps=eps),
        out_shape=jax.ShapeDtypeStruct((mp, N), jnp.float32),
        grid_spec=pltpu.PrefetchScalarGridSpec(
            num_scalar_prefetch=0,
            grid=(mp // tile_m,),
            in_specs=[
                pl.BlockSpec((tile_m, K), lambda i: (i, 0)),
                pl.BlockSpec((K, H), lambda i: (0, 0)),      # resident bf16 weight
                pl.BlockSpec((1, H), lambda i: (0, 0)),
                pl.BlockSpec((1, H), lambda i: (0, 0)),
                pl.BlockSpec((1, H), lambda i: (0, 0)),
                pl.BlockSpec((H, N), lambda i: (0, 0)),      # resident bf16 weight
                pl.BlockSpec((1, N), lambda i: (0, 0)),
            ],
            out_specs=pl.BlockSpec((tile_m, N), lambda i: (i, 0)),
        ),
        compiler_params=pltpu.CompilerParams(
            dimension_semantics=("parallel",),
            vmem_limit_bytes=_VMEM_LIMIT,
        ),
        cost_estimate=cost,
    )(x, w1, b1, gamma, beta, w2, b2)
    return out[:M]


# --------------------------------------------------------------------------
# Full forward pass (wrapper)
# --------------------------------------------------------------------------
def window_attention_forward(x, params, *, heads, head_dim, window_size,
                             relative_pos_embedding=True, fold_output_size=(9, 9),
                             tile_m=64, tile_g=128):
    B, n_h, n_w, dim = x.shape
    inner = heads * head_dim
    ws = window_size
    ws2 = ws * ws
    scale = float(head_dim) ** -0.5

    # bf16 copies of the MXU weights (resident in VMEM; avoids per-step re-casts)
    w_qkv = params["w_qkv"].astype(_MXU_DTYPE)
    w_out1 = params["w_out1"].astype(_MXU_DTYPE)
    w_out2 = params["w_out2"].astype(_MXU_DTYPE)

    # 1. qkv projection (Pallas); emitted in bf16 (consumed in bf16 downstream)
    qkv = _row_matmul(x.reshape(B * n_h * n_w, dim).astype(_MXU_DTYPE), w_qkv,
                      tile_m=tile_m, out_dtype=_MXU_DTYPE)
    qkv = qkv.reshape(B, n_h, n_w, 3 * inner)

    # 2. window extraction (Unfold, stride 2) + rearrange into the lane-dense layout:
    #    group axis G = B*heads*L goes LAST so it maps onto the 128 vreg lanes.
    aa = jnp.transpose(qkv, (0, 3, 1, 2))                    # b c h w
    cols = _unfold(aa, ws, 2)                                # (B, 3*inner*ws2, L)
    L = cols.shape[-1]
    cols = jnp.transpose(cols.reshape(B, 3 * inner, ws2, L), (0, 3, 2, 1))
    cols = cols.reshape(B, L, ws2, 3, heads, head_dim)
    G = B * heads * L
    qkv_g = jnp.transpose(cols, (3, 2, 5, 0, 4, 1)).reshape(3, ws2, head_dim, G)

    # pad the group axis ONCE on the combined slab (not 3 separate q/k/v pads)
    Gp = pl.cdiv(G, tile_g) * tile_g
    if Gp != G:
        qkv_g = jnp.pad(qkv_g, ((0, 0), (0, 0), (0, 0), (0, Gp - G)))
    q_g = qkv_g[0]                                           # (ws2, d, Gp)
    k_g = jnp.transpose(qkv_g[1], (1, 0, 2))                 # (d, ws2, Gp)
    v_g = qkv_g[2]                                           # (ws2, d, Gp)

    # relative position bias table, pre-broadcast over the lane (group) axis
    if relative_pos_embedding:
        rel = get_relative_distances(ws) + ws - 1
        bias = params["pos_embedding"][rel[..., 0], rel[..., 1]]
    else:
        bias = params["pos_embedding"]
    bias_lane = jnp.broadcast_to(bias.astype(jnp.float32)[:, :, None],
                                 (ws2, ws2, tile_g))

    # 3. windowed attention (Pallas, lane-dense VPU kernel, bf16 writeback)
    og = _window_attention(q_g, k_g, v_g, bias_lane, scale=scale, tile_g=tile_g)

    # 4. fold back (overlap-add, f32) + permute
    out = og[:, :, :G].astype(jnp.float32)                   # (ws2, d, G)
    out = out.reshape(ws2, head_dim, B, heads, L)
    out = jnp.transpose(out, (2, 0, 3, 1, 4))                # b wh h d n
    out = out.reshape(B, ws2 * inner, L)
    folded = _fold(out, fold_output_size, ws, 2)             # (B, inner, 9, 9)
    oh, ow = fold_output_size
    y = jnp.transpose(folded, (0, 2, 3, 1)).reshape(B * oh * ow, inner)

    # 5. to_out head (Pallas)
    o = _out_head(y.astype(_MXU_DTYPE), w_out1, params["b_out1"],
                  params["ln_gamma"], params["ln_beta"],
                  w_out2, params["b_out2"], tile_m=tile_m)
    return o.reshape(B, oh, ow, dim)


# --------------------------------------------------------------------------
# Pure-JAX f32 reference (mirrors the PyTorch forward exactly, erf GELU)
# --------------------------------------------------------------------------
def _reference(x, params, *, heads, head_dim, window_size,
               relative_pos_embedding=True, fold_output_size=(9, 9)):
    B, n_h, n_w, dim = x.shape
    inner = heads * head_dim
    ws = window_size
    ws2 = ws * ws
    scale = float(head_dim) ** -0.5

    qkv = (x.reshape(-1, dim) @ params["w_qkv"]).reshape(B, n_h, n_w, 3 * inner)
    aa = jnp.transpose(qkv, (0, 3, 1, 2))
    cols = _unfold(aa, ws, 2)
    L = cols.shape[-1]
    cols = jnp.transpose(cols.reshape(B, 3 * inner, ws2, L), (0, 3, 2, 1))
    q, k, v = jnp.split(cols, 3, axis=-1)

    def to_heads(t):
        return jnp.transpose(t.reshape(B, L, ws2, heads, head_dim), (0, 3, 1, 2, 4))

    q, k, v = map(to_heads, (q, k, v))
    attn = jnp.einsum("bhwid,bhwjd->bhwij", q, k) * scale
    if relative_pos_embedding:
        rel = get_relative_distances(ws) + ws - 1
        attn = attn + params["pos_embedding"][rel[..., 0], rel[..., 1]]
    else:
        attn = attn + params["pos_embedding"]
    attn = jax.nn.softmax(attn, axis=-1)
    out = jnp.einsum("bhwij,bhwjd->bhwid", attn, v)
    out = jnp.transpose(out, (0, 3, 1, 4, 2)).reshape(B, ws2 * inner, L)
    folded = _fold(out, fold_output_size, ws, 2)
    oh, ow = fold_output_size
    y = jnp.transpose(folded, (0, 2, 3, 1)).reshape(-1, inner)

    h = y @ params["w_out1"] + params["b_out1"]
    mu = h.mean(-1, keepdims=True)
    var = jnp.square(h - mu).mean(-1, keepdims=True)
    h = (h - mu) / jnp.sqrt(var + 1e-5)
    h = h * params["ln_gamma"] + params["ln_beta"]
    h = jax.nn.gelu(h, approximate=False)          # torch nn.GELU() default
    o = h @ params["w_out2"] + params["b_out2"]
    return o.reshape(B, oh, ow, dim)


if __name__ == "__main__":
    key = jax.random.PRNGKey(0)
    # 9x9 spatial grid (mandated by Fold(output_size=(9,9))); B=8 so the attention
    # grid has 4 steps at tile_g=128 and the row grids have >= 4 steps at tile_m=64.
    B, n_h, n_w = 8, 9, 9
    dim, heads, head_dim, ws = 32, 4, 8, 3
    inner = heads * head_dim
    dh = dim // 2

    ks = jax.random.split(key, 9)
    x = jax.random.normal(ks[0], (B, n_h, n_w, dim), jnp.float32)
    params = {
        "w_qkv": jax.random.normal(ks[1], (dim, 3 * inner), jnp.float32) / jnp.sqrt(dim),
        "pos_embedding": jax.random.normal(ks[2], (2 * ws - 1, 2 * ws - 1), jnp.float32),
        "w_out1": jax.random.normal(ks[3], (inner, dh), jnp.float32) / jnp.sqrt(inner),
        "b_out1": 0.1 * jax.random.normal(ks[4], (1, dh), jnp.float32),
        "ln_gamma": 1.0 + 0.1 * jax.random.normal(ks[5], (1, dh), jnp.float32),
        "ln_beta": 0.1 * jax.random.normal(ks[6], (1, dh), jnp.float32),
        "w_out2": jax.random.normal(ks[7], (dh, dim), jnp.float32) / jnp.sqrt(dh),
        "b_out2": 0.1 * jax.random.normal(ks[8], (1, dim), jnp.float32),
    }

    out = window_attention_forward(x, params, heads=heads, head_dim=head_dim,
                                   window_size=ws, relative_pos_embedding=True)
    out = jax.block_until_ready(out)

    ref = _reference(x, params, heads=heads, head_dim=head_dim,
                     window_size=ws, relative_pos_embedding=True)

    assert out.shape == (B, n_h, n_w, dim)
    assert bool(jnp.all(jnp.isfinite(out)))
    # Tolerance covers bf16 streamed operands / bf16 attention writeback (f32 math
    # throughout) and tanh-GELU vs the erf-GELU f32 reference.
    assert jnp.allclose(out, ref, atol=5e-2, rtol=5e-2), "mismatch vs reference"
    print("KERNEL_OK")
</pallas_src>

<mosaic_0001>
module attributes {stable_mosaic.version = 11 : i64} {
  func.func @_qkv_kernel(%arg0: i32, %arg1: memref<64x32xbf16, #tpu.memory_space<vmem>>, %arg2: memref<32x96xbf16, #tpu.memory_space<vmem>>, %arg3: memref<64x96xbf16, #tpu.memory_space<vmem>>) attributes {dimension_semantics = [#tpu.dimension_semantics<parallel>], iteration_bounds = array<i64: 11>, scalar_prefetch = 0 : i64, scratch_operands = 0 : i64, tpu.core_type = #tpu.core_type<tc>, window_params = [{transform_indices = @transform_0, window_bounds = array<i64: 64, 32>}, {pipeline_mode = #tpu.pipeline_mode<synchronous>, transform_indices = @transform_1, window_bounds = array<i64: 32, 96>}, {transform_indices = @transform_2, window_bounds = array<i64: 64, 96>}]} {
    %c0 = arith.constant 0 : index
    %c0_0 = arith.constant 0 : index
    %0 = vector.load %arg1[%c0, %c0_0] : memref<64x32xbf16, #tpu.memory_space<vmem>>, vector<64x32xbf16>
    %c0_1 = arith.constant 0 : index
    %c0_2 = arith.constant 0 : index
    %1 = vector.load %arg2[%c0_1, %c0_2] : memref<32x96xbf16, #tpu.memory_space<vmem>>, vector<32x96xbf16>
    %cst = arith.constant dense<0.000000e+00> : vector<64x96xf32>
    %2 = tpu.matmul %0, %1, %cst {dimension_numbers = #tpu.dot_dimension_numbers<[1], [0], [0], [1], [0, 0, 1, 1], [], []>} : vector<64x32xbf16>, vector<32x96xbf16>, vector<64x96xf32> -> vector<64x96xf32>
    %3 = arith.truncf %2 : vector<64x96xf32> to vector<64x96xbf16>
    %c0_3 = arith.constant 0 : index
    %c0_4 = arith.constant 0 : index
    %4 = vector.load %arg3[%c0_3, %c0_4] : memref<64x96xbf16, #tpu.memory_space<vmem>>, vector<64x96xbf16>
    tpu.vector_store %arg3[%c0_3, %c0_4], %3 {strides = array<i32>} : memref<64x96xbf16, #tpu.memory_space<vmem>>, vector<64x96xbf16>,
    return
  }
  func.func @transform_0(%arg0: i32) -> (i32, i32) {
    %c0_i32 = arith.constant 0 : i32
    %c0_i32_0 = arith.constant 0 : i32
    return %arg0, %c0_i32 : i32, i32
  }
  func.func @transform_1(%arg0: i32) -> (i32, i32) {
    %c0_i32 = arith.constant 0 : i32
    %c0_i32_0 = arith.constant 0 : i32
    %c0_i32_1 = arith.constant 0 : i32
    return %c0_i32, %c0_i32_0 : i32, i32
  }
  func.func @transform_2(%arg0: i32) -> (i32, i32) {
    %c0_i32 = arith.constant 0 : i32
    %c0_i32_0 = arith.constant 0 : i32
    return %arg0, %c0_i32 : i32, i32
  }
}

</mosaic_0001>

<llo_original>
// kernel: tpu_custom_call.1
$region0: #{tpu_custom_call.1}
  #allocation0 [shape = 'u32[]', space=smem, size = 0x4, offset = 0x4, fixed_abs, tag = 'smem constant byte address 0x4 - core index']
  #allocation1 [shape = 'u32[144,128]{1,0:T(1,128)}', space=vmem, size = 0x12000, scoped, tag = 'internal scratch']
  %s0 = inlined_call_operand.vmem [shape: bf16[704,32], index: 0, kind: input, shape index: {}]
  %s1 = inlined_call_operand.vmem [shape: bf16[32,96], index: 1, kind: input, shape index: {}]
  %s2 = inlined_call_operand.vmem [shape: bf16[704,96], index: 2, kind: output, shape index: {}]
  %s3 = sld [smem:[#allocation0]]
  $region41: #{tpu_custom_call.1} parent=0
    _
  %s5 = ssub.s32 1, %s3
  %s6 = scalar_select 0, %s5, %s3
  loop: start=0, step=1, limit=13
  $region2: #{tpu_custom_call.1} parent=0 // loop_pre_header
    _
  $region3: #{tpu_custom_call.1} parent=0 // loop_header
    %s8 = sphi 0, %s12
    %p9 = scmp.ge.s32.totalorder %s8, 13
    %s18 = sphi 0, %s20
    %s21 = sphi 0, %s18
    %s22 = sphi 0, %s21
    %s38 = sphi 0, %s22
    %s42 = sphi 0, %s42
    %s44 = sphi 0, %s42
    %s45 = sphi 0, %s44
    %s59 = sphi 0, %s45
    %s65 = sphi 0, %s67
    %s68 = sphi 0, %s65
    %s69 = sphi 0, %s68
    %s85 = sphi 0, %s69
  $region4: #{tpu_custom_call.1} parent=0 // loop_header_branch
    %11 = sbr.rel (%p9) target = $region8
  $region5: #{tpu_custom_call.1} parent=0 // loop_body
    %s13 = ssub.s32 %s8, 1
    %s14 = ssub.s32 %s8, 2
    %s15 = sadd.s32 %s8, 1
    %s16 = ssub.s32 %s8, %s15
    %p17 = scmp.eq.s32.totalorder %s16, 0
    %s19 = sadd.s32 %s18, 1
    %s20 = scalar_select %p17, %s18, %s19
    %p23 = pneg %p17
    %p24 = scmp.eq.s32.totalorder %s8, 10
    %p25 = por %p23, %p24
    %p26 = scmp.ne.s32.totalorder %s18, %s21
    %p27 = scmp.eq.s32.totalorder %s8, 0
    %p28 = por %p26, %p27
    %p29 = scmp.ne.s32.totalorder %s18, %s21
    %p30 = scmp.eq.s32.totalorder %s13, 10
    %p31 = por %p29, %p30
    %p32 = scmp.ne.s32.totalorder %s21, %s22
    %p33 = scmp.eq.s32.totalorder %s13, 0
    %p34 = por %p32, %p33
    %p35 = scmp.ne.s32.totalorder %s21, %s22
    %p36 = scmp.eq.s32.totalorder %s14, 10
    %p37 = por %p35, %p36
    %p39 = scmp.ne.s32.totalorder %s22, %s38
    %p40 = scmp.eq.s32.totalorder %s14, 0
    %p41 = por %p39, %p40
    %s43 = sadd.s32 %s42, 1
    %p46 = scmp.eq.s32.totalorder %s8, 10
    %p47 = scmp.ne.s32.totalorder %s42, %s44
    %p48 = scmp.eq.s32.totalorder %s8, 0
    %p49 = por %p47, %p48
    %p50 = scmp.ne.s32.totalorder %s42, %s44
    %p51 = scmp.eq.s32.totalorder %s13, 10
    %p52 = por %p50, %p51
    %p53 = scmp.ne.s32.totalorder %s44, %s45
    %p54 = scmp.eq.s32.totalorder %s13, 0
    %p55 = por %p53, %p54
    %p56 = scmp.ne.s32.totalorder %s44, %s45
    %p57 = scmp.eq.s32.totalorder %s14, 10
    %p58 = por %p56, %p57
    %p60 = scmp.ne.s32.totalorder %s45, %s59
    %p61 = scmp.eq.s32.totalorder %s14, 0
    %p62 = por %p60, %p61
    %s63 = ssub.s32 %s8, %s15
    %p64 = scmp.eq.s32.totalorder %s63, 0
    %s66 = sadd.s32 %s65, 1
    %s67 = scalar_select %p64, %s65, %s66
    %p70 = pneg %p64
    %p71 = scmp.eq.s32.totalorder %s8, 10
    %p72 = por %p70, %p71
    %p73 = scmp.ne.s32.totalorder %s65, %s68
    %p74 = scmp.eq.s32.totalorder %s8, 0
    %p75 = por %p73, %p74
    %p76 = scmp.ne.s32.totalorder %s65, %s68
    %p77 = scmp.eq.s32.totalorder %s13, 10
    %p78 = por %p76, %p77
    %p79 = scmp.ne.s32.totalorder %s68, %s69
    %p80 = scmp.eq.s32.totalorder %s13, 0
    %p81 = por %p79, %p80
    %p82 = scmp.ne.s32.totalorder %s68, %s69
    %p83 = scmp.eq.s32.totalorder %s14, 10
    %p84 = por %p82, %p83
    %p86 = scmp.ne.s32.totalorder %s69, %s85
    %p87 = scmp.eq.s32.totalorder %s14, 0
    %p88 = por %p86, %p87
    %p89 = scmp.le.s32.totalorder 1, %s8
    %p90 = scmp.lt.s32.totalorder %s8, 12
    %p91 = pnand %p89, %p90
    %p92 = pneg %p91
    // Predicated region
    $region9: #{tpu_custom_call.1} parent=5 // pred_check
      _
    $region10: #{tpu_custom_call.1} parent=5 // pred_check_branch
      %94 = sbr.rel (%p91) target = $region12
    $region11: #{tpu_custom_call.1} parent=5 // pred_region
      %s95 = ssub.s32 %s8, 1
      // Predicated region
      $region13: #{tpu_custom_call.1} parent=11 // pred_check
        %p96 = pneg %p55
      $region14: #{tpu_custom_call.1} parent=11 // pred_check_branch
        %98 = sbr.rel (%p96) target = $region16
      $region15: #{tpu_custom_call.1} parent=11 // pred_region
        _
      $region16: #{tpu_custom_call.1} parent=11 // pred_fallthru
        _
    $region12: #{tpu_custom_call.1} parent=5 // pred_fallthru
      _
    %p99 = scmp.lt.s32.totalorder %s8, 11
    // Predicated region
    $region17: #{tpu_custom_call.1} parent=5 // pred_check
      %p100 = pneg %p99
    $region18: #{tpu_custom_call.1} parent=5 // pred_check_branch
      %102 = sbr.rel (%p100) target = $region20
    $region19: #{tpu_custom_call.1} parent=5 // pred_region
      // Predicated region
      $region21: #{tpu_custom_call.1} parent=19 // pred_check
        %p103 = pneg %p28
      $region22: #{tpu_custom_call.1} parent=19 // pred_check_branch
        %105 = sbr.rel (%p103) target = $region24
      $region23: #{tpu_custom_call.1} parent=19 // pred_region
        %s106 = smul.u32 8, %s8
        %p107 = scmp.lt.s32.totalorder %s106, 87
        %s108 = scalar_select %p107, %s106, 87
        %s109 = smul.addr %s108, 4
        %s110 = scalar_lea.vmem %s0, %s109
        %s111 = smul.u32 8, %s8
      $region24: #{tpu_custom_call.1} parent=19 // pred_fallthru
        _
    $region20: #{tpu_custom_call.1} parent=5 // pred_fallthru
      _
    %p112 = scmp.le.s32.totalorder 1, %s8
    %p113 = scmp.lt.s32.totalorder %s8, 12
    %p114 = pnand %p112, %p113
    %p115 = pneg %p114
    // Predicated region
    $region25: #{tpu_custom_call.1} parent=5 // pred_check
      _
    $region26: #{tpu_custom_call.1} parent=5 // pred_check_branch
      %117 = sbr.rel (%p114) target = $region28
    $region27: #{tpu_custom_call.1} parent=5 // pred_region
      %s118 = ssub.s32 %s8, 1
      %s119 = smul.u32 8, %s13
      %p120 = scmp.lt.s32.totalorder %s119, 87
      %s121 = scalar_select %p120, %s119, 87
      %s122 = smul.addr %s121, 4
      %s123 = scalar_lea.vmem %s0, %s122
      %p124 = pneg %p34
      %p125 = pneg %p31
      %p126 = pneg %p55
      %p127 = pneg %p52
      %p128 = pneg %p81
      %p129 = pneg %p78
      %s130 = smul.u32 8, %s13
      %p131 = scmp.lt.s32.totalorder %s130, 87
      %s132 = scalar_select %p131, %s130, 87
      %s133 = smul.addr %s132, 4
      %s134 = scalar_lea.vmem %s2, %s133
      %s135 = smul.u32 8, %s13
      %p136 = scmp.lt.s32.totalorder %s135, 87
      %s137 = scalar_select %p136, %s135, 87
      %s138 = smul.addr %s137, 4
      %s139 = scalar_lea.vmem %s0, %s138
      %s140 = smul.u32 8, %s13
      %s141 = smul.u32 8, %s13
      %p142 = scmp.lt.s32.totalorder %s141, 87
      %s143 = scalar_select %p142, %s141, 87
      %s144 = smul.addr %s143, 4
      %s145 = scalar_lea.vmem %s2, %s144
      %s146 = smul.u32 8, %s13
      %v148 = vld [vmem:[%s139] sm:$0xf]
      %v149 = vld [vmem:[%s139 + $0x4] sm:$0xf]
      %v150 = vld [vmem:[%s139 + $0x8] sm:$0xf]
      %v151 = vld [vmem:[%s139 + $0xc] sm:$0xf]
      %v152 = vld [vmem:[%s139 + $0x10] sm:$0xf]
      %v153 = vld [vmem:[%s139 + $0x14] sm:$0xf]
      %v154 = vld [vmem:[%s139 + $0x18] sm:$0xf]
      %v155 = vld [vmem:[%s139 + $0x1c] sm:$0xf]
      %v156 = vld [vmem:[%s1] sm:$0xf]
      %v157 = vld [vmem:[%s1 + $0x4] sm:$0xf]
      %v158 = vld [vmem:[%s1 + $0x8] sm:$0xf]
      %v159 = vld [vmem:[%s1 + $0xc] sm:$0xf]
      %v168 = vunpack.c.l.b16 %v148
      %v169 = vunpack.c.l.b16 %v149
      %v170 = vunpack.c.l.b16 %v150
      %v171 = vunpack.c.l.b16 %v151
      %v172 = vunpack.c.l.b16 %v152
      %v173 = vunpack.c.l.b16 %v153
      %v174 = vunpack.c.l.b16 %v154
      %v175 = vunpack.c.l.b16 %v155
      %v176 = vpack.c.b16 %v169, %v168
      %v177 = vpack.c.b16 %v171, %v170
      %v178 = vpack.c.b16 %v173, %v172
      %v179 = vpack.c.b16 %v175, %v174
      %v184 = vunpack.c.l.b16 %v156
      %v185 = vunpack.c.l.b16 %v157
      %v186 = vunpack.c.l.b16 %v158
      %v187 = vunpack.c.l.b16 %v159
      %v188 = vpack.c.b16 %v185, %v184
      %v189 = vpack.c.b16 %v187, %v186
      %vm192 = vcmask 261120
      %v194 = vsel %vm192, %v176, 0
      %v197 = vsel %vm192, %v177, 0
      %v200 = vsel %vm192, %v178, 0
      %v203 = vsel %vm192, %v179, 0
      %205 = vmatprep.subr.bf16.mxu0 0
      %206 = vmatpush1.bf16.msra.mxu0 %v188
      %207 = vmatprep.subr.bf16.mxu0 0
      %208 = vmatpush1.bf16.msra.mxu0 %v189
      %209 = vmatprep.subr.bf16.mxu0 0
      %210 = vmatpush1.bf16.msra.mxu0 0
      %211 = vmatprep.subr.bf16.mxu0 0
      %212 = vmatpush1.bf16.msra.mxu0 0
      %213 = vmatprep.subr.bf16.mxu0 0
      %214 = vmatpush1.bf16.msra.mxu0 0
      %215 = vmatprep.subr.bf16.mxu0 0
      %216 = vmatpush1.bf16.msra.mxu0 0
      %217 = vmatprep.subr.bf16.mxu0 0
      %218 = vmatpush1.bf16.msra.mxu0 0
      %219 = vmatprep.subr.bf16.mxu0 0
      %220 = vmatpush1.bf16.msra.mxu0 0
      %221 = vmatprep.subr.bf16.mxu0 0
      %222 = vmatpush1.bf16.msra.mxu0 0
      %223 = vmatprep.subr.bf16.mxu0 0
      %224 = vmatpush1.bf16.msra.mxu0 0
      %225 = vmatprep.subr.bf16.mxu0 0
      %226 = vmatpush1.bf16.msra.mxu0 0
      %227 = vmatprep.subr.bf16.mxu0 0
      %228 = vmatpush1.bf16.msra.mxu0 0
      %229 = vmatprep.subr.bf16.mxu0 0
      %230 = vmatpush1.bf16.msra.mxu0 0
      %231 = vmatprep.subr.bf16.mxu0 0
      %232 = vmatpush1.bf16.msra.mxu0 0
      %233 = vmatprep.subr.bf16.mxu0 0
      %234 = vmatpush1.bf16.msra.mxu0 0
      %235 = vmatprep.subr.bf16.mxu0 0
      %236 = vmatpush1.bf16.msra.mxu0 0
      %237 = vmatprep.mubr.bf16.mxu0 0
      %238 = vmatmul.mubr.bf16.gmra.mrb[0].mxu0 %v194
      %v239 = vpop.f32.mrb[0].mxu0
      %v240 = vadd.f32 0.0, %v239
      %v241 = vpop.f32.mrb[0].mxu0
      %v242 = vpop.f32.mrb[0].mxu0
      %v243 = vadd.f32 0.0, %v242
      %v244 = vpop.f32.mrb[0].mxu0
      %245 = vmatprep.mubr.bf16.mxu0 0
      %246 = vmatmul.mubr.bf16.gmra.mrb[0].mxu0 %v197
      %v247 = vpop.f32.mrb[0].mxu0
      %v248 = vadd.f32 0.0, %v247
      %v249 = vpop.f32.mrb[0].mxu0
      %v250 = vpop.f32.mrb[0].mxu0
      %v251 = vadd.f32 0.0, %v250
      %v252 = vpop.f32.mrb[0].mxu0
      %253 = vmatprep.mubr.bf16.mxu0 0
      %254 = vmatmul.mubr.bf16.gmra.mrb[0].mxu0 %v200
      %v255 = vpop.f32.mrb[0].mxu0
      %v256 = vadd.f32 0.0, %v255
      %v257 = vpop.f32.mrb[0].mxu0
      %v258 = vpop.f32.mrb[0].mxu0
      %v259 = vadd.f32 0.0, %v258
      %v260 = vpop.f32.mrb[0].mxu0
      %261 = vmatprep.mubr.bf16.mxu0 0
      %262 = vmatmul.mubr.bf16.gmra.mrb[0].mxu0 %v203
      %v263 = vpop.f32.mrb[0].mxu0
      %v264 = vadd.f32 0.0, %v263
      %v265 = vpop.f32.mrb[0].mxu0
      %v266 = vpop.f32.mrb[0].mxu0
      %v267 = vadd.f32 0.0, %v266
      %v268 = vpop.f32.mrb[0].mxu0
      %269 = vdwg.mxu0
      %v270 = vpack.c.bf16 %v243, %v240
      %v271 = vpack.c.bf16 %v251, %v248
      %v272 = vpack.c.bf16 %v259, %v256
      %v273 = vpack.c.bf16 %v267, %v264
      %v278 = vunpack.c.l.b16 %v270
      %v279 = vunpack.c.h.b16 %v270
      %v280 = vunpack.c.l.b16 %v271
      %v281 = vunpack.c.h.b16 %v271
      %v282 = vunpack.c.l.b16 %v272
      %v283 = vunpack.c.h.b16 %v272
      %v284 = vunpack.c.l.b16 %v273
      %v285 = vunpack.c.h.b16 %v273
      %v286 = vpack.c.b16 %v278, %v278
      %v287 = vpack.c.b16 %v279, %v279
      %v288 = vpack.c.b16 %v280, %v280
      %v289 = vpack.c.b16 %v281, %v281
      %v290 = vpack.c.b16 %v282, %v282
      %v291 = vpack.c.b16 %v283, %v283
      %v292 = vpack.c.b16 %v284, %v284
      %v293 = vpack.c.b16 %v285, %v285
      %vm302 = vcmask 781312
      %303 = vst.msk [vmem:[%s145] sm:$0xf] %vm302, %v286
      %304 = vst.msk [vmem:[%s145 + $0x4] sm:$0xf] %vm302, %v287
      %305 = vst.msk [vmem:[%s145 + $0x8] sm:$0xf] %vm302, %v288
      %306 = vst.msk [vmem:[%s145 + $0xc] sm:$0xf] %vm302, %v289
      %307 = vst.msk [vmem:[%s145 + $0x10] sm:$0xf] %vm302, %v290
      %308 = vst.msk [vmem:[%s145 + $0x14] sm:$0xf] %vm302, %v291
      %309 = vst.msk [vmem:[%s145 + $0x18] sm:$0xf] %vm302, %v292
      %310 = vst.msk [vmem:[%s145 + $0x1c] sm:$0xf] %vm302, %v293
      %s311 = smul.u32 8, %s13
      %p312 = scmp.lt.s32.totalorder %s311, 87
      %s313 = scalar_select %p312, %s311, 87
      %s314 = smul.addr %s313, 4
      %s315 = scalar_lea.vmem %s2, %s314
      // Predicated region
      $region29: #{tpu_custom_call.1} parent=27 // pred_check
        %p316 = pneg %p78
      $region30: #{tpu_custom_call.1} parent=27 // pred_check_branch
        %318 = sbr.rel (%p316) target = $region32
      $region31: #{tpu_custom_call.1} parent=27 // pred_region
        %s319 = smul.u32 8, %s13
      $region32: #{tpu_custom_call.1} parent=27 // pred_fallthru
        _
    $region28: #{tpu_custom_call.1} parent=5 // pred_fallthru
      _
    %p320 = scmp.le.s32.totalorder 2, %s8
    // Predicated region
    $region33: #{tpu_custom_call.1} parent=5 // pred_check
      %p321 = pneg %p320
    $region34: #{tpu_custom_call.1} parent=5 // pred_check_branch
      %323 = sbr.rel (%p321) target = $region36
    $region35: #{tpu_custom_call.1} parent=5 // pred_region
      %s324 = ssub.s32 %s8, 2
      // Predicated region
      $region37: #{tpu_custom_call.1} parent=35 // pred_check
        %p325 = pneg %p84
      $region38: #{tpu_custom_call.1} parent=35 // pred_check_branch
        %327 = sbr.rel (%p325) target = $region40
      $region39: #{tpu_custom_call.1} parent=35 // pred_region
        %s328 = smul.u32 8, %s14
        %p329 = scmp.lt.s32.totalorder %s328, 87
        %s330 = scalar_select %p329, %s328, 87
        %s331 = smul.addr %s330, 4
        %s332 = scalar_lea.vmem %s2, %s331
      $region40: #{tpu_custom_call.1} parent=35 // pred_fallthru
        _
    $region36: #{tpu_custom_call.1} parent=5 // pred_fallthru
      _
  $region6: #{tpu_custom_call.1} parent=0 // loop_footer
    %s12 = sadd.s32 1, %s8
  $region7: #{tpu_custom_call.1} parent=0 // loop_footer_branch
    %7 = sbr.rel target = $region3
  $region8: #{tpu_custom_call.1} parent=0 // loop_exit
    _

</llo_original>
